<compile_context>
chip_gen: v6e
topology: v6e:2x2x1
jax: 0.10.0
libtpu: 0.0.40
codegen_flags: <defaults>
</compile_context>

<pallas_src>
import functools

import jax
import jax.numpy as jnp
from jax.experimental import pallas as pl
from jax.experimental.pallas import tpu as pltpu

_LANE = 128
_MAX_LANE_TILE = 4096  # 16 KiB f32 contiguous per row chunk; caps lane-fold unroll at 32.


def _round_up(x, m):
    return ((x + m - 1) // m) * m


def _cdiv(a, b):
    return (a + b - 1) // b


def _vmem_capacity_bytes():
    """Physical per-core VMEM (128 MiB v5e/v6e, 64 MiB v7x). Conservative fallback."""
    try:
        cap = getattr(pltpu.get_tpu_info(), "vmem_capacity_bytes", None)
        if cap:
            return int(cap)
    except Exception:
        pass
    return 64 * 1024 * 1024


def _scale_rmse_kernel(x_ref, y_ref, w2_ref, o_ref, acc_ref, *,
                       n_rows, n_cols, row_tile, lane_tile, acc_lanes,
                       mask_rows, mask_cols):
    i = pl.program_id(0)
    j = pl.program_id(1)

    @pl.when(j == 0)
    def _():
        acc_ref[...] = jnp.zeros_like(acc_ref)

    d = x_ref[...].astype(jnp.float32) - y_ref[...].astype(jnp.float32)
    # Bias of the affine Scale cancels; per-channel w^2 arrives as a per-row column.
    # The w^2 weighting must stay per-step (different row blocks -> different weights).
    contrib = w2_ref[...] * (d * d)                        # (row_tile, lane_tile)

    # Zero ragged-edge contributions in-kernel (no jnp.pad in the wrapper).
    # These branches are trace-time Python bools; aligned shapes pay nothing.
    if mask_rows or mask_cols:
        mask = None
        if mask_rows:
            rows = jax.lax.broadcasted_iota(jnp.int32, (row_tile, lane_tile), 0)
            mask = (rows + i * row_tile) < n_rows
        if mask_cols:
            cols = jax.lax.broadcasted_iota(jnp.int32, (row_tile, lane_tile), 1)
            cmask = (cols + j * lane_tile) < n_cols
            mask = cmask if mask is None else jnp.logical_and(mask, cmask)
        contrib = jnp.where(mask, contrib, 0.0)

    # Fold lanes into an acc_lanes-wide accumulator using lane-aligned static slices
    # (pure VALU adds; no XLU, no relayout).
    n_fold = lane_tile // acc_lanes
    folded = contrib[:, 0:acc_lanes]
    for t in range(1, n_fold):
        folded = folded + contrib[:, t * acc_lanes:(t + 1) * acc_lanes]
    acc_ref[...] += folded                                 # (row_tile, acc_lanes)

    # Per-row-block partial sum, written once per i so the i axis can be "parallel"
    # (v7x megacore).  Final cross-block sum + sqrt happen in plain JAX.
    @pl.when(j == pl.num_programs(1) - 1)
    def _():
        acc = acc_ref[...]
        # row_tile is always a multiple of 8: this reshape is the natural vreg tiling.
        o_ref[...] = acc.reshape(row_tile // 8, 8, acc_lanes).sum(axis=0)


def scale_rmse(x, y, w, b=None, *, target_block_elems=None):
    """Scaled RMSE: sqrt(mean(((x - y) * w[c])**2)) for a per-channel affine Scale.

    x, y: (B, C, H, W) arrays (NCHW, like PyTorch); f32 or bf16 (f32 accumulation).
    w, b: (C,) Scale parameters.  `b` is accepted for API parity but cancels exactly.
    Returns a scalar float32.
    """
    del b  # bias cancels: (x*w+b) - (y*w+b) == (x-y)*w
    B, C, H, W = x.shape
    assert y.shape == x.shape
    R, L = B * C, H * W
    n_elems = R * L
    itemsize = jnp.dtype(x.dtype).itemsize

    # Free views (no transpose, no extra HBM pass): long spatial axis on lanes.
    x2 = x.reshape(R, L)
    y2 = y.reshape(R, L)
    # Per-row weight^2: row r = b*C + c  ->  channel c = r % C.
    w2_rows = jnp.tile(jnp.asarray(w, jnp.float32) ** 2, (B,)).reshape(R, 1)

    # ---- generation-gated block sizing (128 MiB VMEM v5e/v6e, 64 MiB v7x) ---------
    vmem_cap = _vmem_capacity_bytes()
    if target_block_elems is None:
        # Leave room for 2 inputs x 2 buffers + f32 temporaries + accumulator.
        per_input_block_bytes = min(vmem_cap // 12, 8 * 1024 * 1024)
        target_block_elems = max(1 << 20, per_input_block_bytes // itemsize)

    sub = max(8, 32 // max(1, itemsize))        # f32: 8 sublanes, bf16: 16, int8: 32

    # ---- lane tile: prefer full (contiguous) rows; else large balanced chunks ------
    L128 = _round_up(L, _LANE)
    if L <= _LANE:
        lane_tile = L                           # equals full array dim
    elif L128 * sub <= target_block_elems:
        lane_tile = L128                        # whole rows -> fully contiguous DMA
    else:
        lane_tile = min(L128, _MAX_LANE_TILE)
        nj = _cdiv(L, lane_tile)
        lane_tile = _round_up(_cdiv(L, nj), _LANE)   # minimize ragged overhang
    n_j = _cdiv(L, lane_tile)
    acc_lanes = min(_LANE, lane_tile)

    # ---- row tile: fill the budget, rebalanced so the ragged overhang is minimal ---
    rows_target = max(sub, target_block_elems // lane_tile)
    row_tile = min(_round_up(R, sub), _round_up(rows_target, sub))
    n_i = _cdiv(R, row_tile)
    row_tile = _round_up(_cdiv(R, n_i), sub)
    n_i = _cdiv(R, row_tile)
    if n_i == 1 and R > sub:
        # Give the "parallel" axis >= 2 blocks so both v7x TensorCores get work.
        row_tile = _round_up(_cdiv(R, 2), sub)
        n_i = _cdiv(R, row_tile)

    grid = (n_i, n_j)
    mask_rows = (R % row_tile) != 0
    mask_cols = (L % lane_tile) != 0

    kernel = functools.partial(
        _scale_rmse_kernel,
        n_rows=R, n_cols=L, row_tile=row_tile, lane_tile=lane_tile,
        acc_lanes=acc_lanes, mask_rows=mask_rows, mask_cols=mask_cols)

    block_bytes = row_tile * lane_tile * itemsize
    temp_bytes = 2 * row_tile * lane_tile * 4          # f32 diff / contrib temporaries
    acc_bytes = row_tile * acc_lanes * 4
    vmem_limit = max(32 << 20,
                     min(4 * block_bytes + temp_bytes + acc_bytes + (4 << 20),
                         (vmem_cap * 7) // 8))

    partials = pl.pallas_call(
        kernel,
        out_shape=jax.ShapeDtypeStruct((8 * n_i, acc_lanes), jnp.float32),
        grid_spec=pltpu.PrefetchScalarGridSpec(
            num_scalar_prefetch=0,
            grid=grid,
            in_specs=[
                pl.BlockSpec((row_tile, lane_tile), lambda i, j: (i, j)),
                pl.BlockSpec((row_tile, lane_tile), lambda i, j: (i, j)),
                pl.BlockSpec((row_tile, 1), lambda i, j: (i, 0)),
            ],
            out_specs=pl.BlockSpec((8, acc_lanes), lambda i, j: (i, 0)),
            scratch_shapes=[pltpu.VMEM((row_tile, acc_lanes), jnp.float32)],
        ),
        compiler_params=pltpu.CompilerParams(
            # Row-block axis is independent (own output block per i) -> megacore
            # shardable on v7x; lane-block axis carries the accumulator -> arbitrary.
            dimension_semantics=("parallel", "arbitrary"),
            vmem_limit_bytes=int(vmem_limit),
        ),
        cost_estimate=pl.CostEstimate(
            flops=4 * n_elems,
            transcendentals=0,
            bytes_accessed=2 * n_elems * itemsize + R * 4 + 8 * n_i * acc_lanes * 4,
        ),
    )(x2, y2, w2_rows)

    total = jnp.sum(partials)                   # tiny (8*n_i, acc_lanes) reduce in XLA
    return jnp.sqrt(total / n_elems)


if __name__ == "__main__":
    key = jax.random.PRNGKey(0)
    kx, ky = jax.random.split(key)

    B, C, H, W = 2, 4, 16, 16
    x = jax.random.normal(kx, (B, C, H, W), dtype=jnp.float32)
    y = jax.random.normal(ky, (B, C, H, W), dtype=jnp.float32)

    # Deterministic Scale parameters (per-channel affine).
    w = jnp.linspace(0.5, 2.0, C, dtype=jnp.float32)
    b = jnp.linspace(-0.25, 0.25, C, dtype=jnp.float32)

    out = scale_rmse(x, y, w, b)
    out = jax.block_until_ready(out)

    # Pure-JAX reference check.
    wb = w.reshape(1, C, 1, 1)
    bb = b.reshape(1, C, 1, 1)
    ref = jnp.sqrt(jnp.mean(((x * wb + bb) - (y * wb + bb)) ** 2))
    assert jnp.allclose(out, ref, rtol=1e-5, atol=1e-6), (out, ref)

    print("KERNEL_OK")
</pallas_src>

<mosaic_0001>
module attributes {stable_mosaic.version = 11 : i64} {
  func.func @_scale_rmse_kernel(%arg0: i32, %arg1: i32, %arg2: memref<8x256xf32, #tpu.memory_space<vmem>>, %arg3: memref<8x256xf32, #tpu.memory_space<vmem>>, %arg4: memref<8x1xf32, #tpu.memory_space<vmem>>, %arg5: memref<8x128xf32, #tpu.memory_space<vmem>>, %arg6: memref<8x128xf32, #tpu.memory_space<vmem>>) attributes {dimension_semantics = [#tpu.dimension_semantics<parallel>, #tpu.dimension_semantics<arbitrary>], iteration_bounds = array<i64: 1, 1>, scalar_prefetch = 0 : i64, scratch_operands = 1 : i64, tpu.core_type = #tpu.core_type<tc>, window_params = [{transform_indices = @transform_0, window_bounds = array<i64: 8, 256>}, {transform_indices = @transform_1, window_bounds = array<i64: 8, 256>}, {transform_indices = @transform_2, window_bounds = array<i64: 8, 1>}, {transform_indices = @transform_3, window_bounds = array<i64: 8, 128>}]} {
    %c0_i32 = arith.constant 0 : i32
    %0 = arith.cmpi eq, %arg1, %c0_i32 : i32
    %1 = arith.extui %0 : i1 to i32
    %c0_i32_0 = arith.constant 0 : i32
    %2 = arith.cmpi ne, %1, %c0_i32_0 : i32
    scf.if %2 {
      %cst = arith.constant 0.000000e+00 : f32
      %19 = vector.broadcast %cst : f32 to vector<8x128xf32>
      %c0_12 = arith.constant 0 : index
      %c0_13 = arith.constant 0 : index
      %20 = vector.load %arg6[%c0_12, %c0_13] : memref<8x128xf32, #tpu.memory_space<vmem>>, vector<8x128xf32>
      tpu.vector_store %arg6[%c0_12, %c0_13], %19 {strides = array<i32>} : memref<8x128xf32, #tpu.memory_space<vmem>>, vector<8x128xf32>,
    } else {
    }
    %c0 = arith.constant 0 : index
    %c0_1 = arith.constant 0 : index
    %3 = vector.load %arg2[%c0, %c0_1] : memref<8x256xf32, #tpu.memory_space<vmem>>, vector<8x256xf32>
    %c0_2 = arith.constant 0 : index
    %c0_3 = arith.constant 0 : index
    %4 = vector.load %arg3[%c0_2, %c0_3] : memref<8x256xf32, #tpu.memory_space<vmem>>, vector<8x256xf32>
    %5 = arith.subf %3, %4 : vector<8x256xf32>
    %c0_4 = arith.constant 0 : index
    %c0_5 = arith.constant 0 : index
    %6 = vector.load %arg4[%c0_4, %c0_5] : memref<8x1xf32, #tpu.memory_space<vmem>>, vector<8x1xf32>
    %7 = arith.mulf %5, %5 : vector<8x256xf32>
    %8 = vector.broadcast %6 : vector<8x1xf32> to vector<8x256xf32>
    %9 = arith.mulf %8, %7 : vector<8x256xf32>
    %10 = vector.extract_strided_slice %9 {offsets = [0, 0], sizes = [8, 128], strides = [1, 1]} : vector<8x256xf32> to vector<8x128xf32>
    %11 = vector.extract_strided_slice %9 {offsets = [0, 128], sizes = [8, 128], strides = [1, 1]} : vector<8x256xf32> to vector<8x128xf32>
    %12 = arith.addf %10, %11 : vector<8x128xf32>
    %c0_6 = arith.constant 0 : index
    %c0_7 = arith.constant 0 : index
    %13 = vector.load %arg6[%c0_6, %c0_7] : memref<8x128xf32, #tpu.memory_space<vmem>>, vector<8x128xf32>
    %14 = arith.addf %13, %12 : vector<8x128xf32>
    %c0_8 = arith.constant 0 : index
    %c0_9 = arith.constant 0 : index
    %15 = vector.load %arg6[%c0_8, %c0_9] : memref<8x128xf32, #tpu.memory_space<vmem>>, vector<8x128xf32>
    tpu.vector_store %arg6[%c0_8, %c0_9], %14 {strides = array<i32>} : memref<8x128xf32, #tpu.memory_space<vmem>>, vector<8x128xf32>,
    %c0_i32_10 = arith.constant 0 : i32
    %16 = arith.cmpi eq, %arg1, %c0_i32_10 : i32
    %17 = arith.extui %16 : i1 to i32
    %c0_i32_11 = arith.constant 0 : i32
    %18 = arith.cmpi ne, %17, %c0_i32_11 : i32
    scf.if %18 {
      %c0_12 = arith.constant 0 : index
      %c0_13 = arith.constant 0 : index
      %19 = vector.load %arg6[%c0_12, %c0_13] : memref<8x128xf32, #tpu.memory_space<vmem>>, vector<8x128xf32>
      %20 = vector.shape_cast %19 : vector<8x128xf32> to vector<1x8x128xf32>
      %cst = arith.constant dense<0.000000e+00> : vector<8x128xf32>
      %21 = vector.multi_reduction <add>, %20, %cst [0] : vector<1x8x128xf32> to vector<8x128xf32>
      %c0_14 = arith.constant 0 : index
      %c0_15 = arith.constant 0 : index
      %22 = vector.load %arg5[%c0_14, %c0_15] : memref<8x128xf32, #tpu.memory_space<vmem>>, vector<8x128xf32>
      tpu.vector_store %arg5[%c0_14, %c0_15], %21 {strides = array<i32>} : memref<8x128xf32, #tpu.memory_space<vmem>>, vector<8x128xf32>,
    } else {
    }
    return
  }
  func.func @transform_0(%arg0: i32, %arg1: i32) -> (i32, i32) {
    %c0_i32 = arith.constant 0 : i32
    return %arg0, %arg1 : i32, i32
  }
  func.func @transform_1(%arg0: i32, %arg1: i32) -> (i32, i32) {
    %c0_i32 = arith.constant 0 : i32
    return %arg0, %arg1 : i32, i32
  }
  func.func @transform_2(%arg0: i32, %arg1: i32) -> (i32, i32) {
    %c0_i32 = arith.constant 0 : i32
    %c0_i32_0 = arith.constant 0 : i32
    return %arg0, %c0_i32 : i32, i32
  }
  func.func @transform_3(%arg0: i32, %arg1: i32) -> (i32, i32) {
    %c0_i32 = arith.constant 0 : i32
    %c0_i32_0 = arith.constant 0 : i32
    return %arg0, %c0_i32 : i32, i32
  }
}

</mosaic_0001>

<llo_original>
// kernel: tpu_custom_call.1
$region0: #{tpu_custom_call.1}
  #allocation0 [shape = 'u32[]', space=smem, size = 0x4, offset = 0x4, fixed_abs, tag = 'smem constant byte address 0x4 - core index']
  #allocation1 [shape = 'u32[144,128]{1,0:T(1,128)}', space=vmem, size = 0x12000, scoped, tag = 'internal scratch']
  #allocation2 [shape = 'f32[8,128]{1,0:T(8,128)}', space=vmem, size = 0x1000, scoped, tag = 'scratch operand']
  %s0 = inlined_call_operand.hbm [shape: f32[8,256], index: 0, kind: input, shape index: {}]
  %s1 = inlined_call_operand.hbm [shape: f32[8,256], index: 1, kind: input, shape index: {}]
  %s2 = inlined_call_operand.vmem [shape: f32[8,1], index: 2, kind: input, shape index: {}]
  %s3 = inlined_call_operand.hbm [shape: f32[8,128], index: 3, kind: output, shape index: {}]
  %s4 = sld [smem:[#allocation0]]
  $region38: #{tpu_custom_call.1} parent=0
    _
  %s6 = ssub.s32 1, %s4
  %s7 = scalar_select 0, %s6, %s4
  $region1: #{tpu_custom_call.1} parent=0
    #allocation3 [shape = 'u8[8192]{0}', space=vmem, size = 0x2000, scoped, tag = 'input window, operand 0, single buffered']
    #allocation4 [shape = 's32[1]{0}', space=sflag, size = 0x4, scoped, tag = 'scoped memory for tpu_custom_call.1']
    #allocation5 [shape = 's32[1]{0}', space=sflag, size = 0x4, scoped, tag = 'scoped memory for tpu_custom_call.1']
    #allocation6 [shape = 'u8[8192]{0}', space=vmem, size = 0x2000, scoped, tag = 'input window, operand 1, single buffered']
    #allocation7 [shape = 's32[1]{0}', space=sflag, size = 0x4, scoped, tag = 'scoped memory for tpu_custom_call.1']
    #allocation8 [shape = 'u8[4096]{0}', space=vmem, size = 0x1000, scoped, tag = 'output window, operand 0, single buffered']
    %8 = vsyncpa [#allocation4], 0
    %9 = vsyncpa [#allocation7], 0
    %10 = vsyncpa [#allocation5], 0
    // Predicated region
    $region2: #{tpu_custom_call.1} parent=1 // pred_check
      _
    $region3: #{tpu_custom_call.1} parent=1 // pred_check_branch
      %12 = sbr.rel (0) target = $region5
    $region4: #{tpu_custom_call.1} parent=1 // pred_region
      %s14 = ssub.s32 256, 256
      %15 = vsyncadd [#allocation4], %s14
      %s17 = sshll.u32 [#allocation3], 4
      %s18 = int_to_ptr.vmem [resolvable:$true] %s17
      %20 = dma.hbm_to_vmem [thread:$0]  %s0, 256, %s18, [#allocation4]
    $region5: #{tpu_custom_call.1} parent=1 // pred_fallthru
      _
    // Predicated region
    $region6: #{tpu_custom_call.1} parent=1 // pred_check
      _
    $region7: #{tpu_custom_call.1} parent=1 // pred_check_branch
      %22 = sbr.rel (0) target = $region9
    $region8: #{tpu_custom_call.1} parent=1 // pred_region
      %s24 = ssub.s32 256, 256
      %25 = vsyncadd [#allocation7], %s24
      %s27 = sshll.u32 [#allocation6], 4
      %s28 = int_to_ptr.vmem [resolvable:$true] %s27
      %30 = dma.hbm_to_vmem [thread:$0]  %s1, 256, %s28, [#allocation7]
    $region9: #{tpu_custom_call.1} parent=1 // pred_fallthru
      _
    // Predicated region
    $region10: #{tpu_custom_call.1} parent=1 // pred_check
      _
    $region11: #{tpu_custom_call.1} parent=1 // pred_check_branch
      %32 = sbr.rel (0) target = $region13
    $region12: #{tpu_custom_call.1} parent=1 // pred_region
      _
    $region13: #{tpu_custom_call.1} parent=1 // pred_fallthru
      _
    // Predicated region
    $region14: #{tpu_custom_call.1} parent=1 // pred_check
      _
    $region15: #{tpu_custom_call.1} parent=1 // pred_check_branch
      %34 = sbr.rel (0) target = $region17
    $region16: #{tpu_custom_call.1} parent=1 // pred_region
      %35 = dma.done [#allocation4], 256
    $region17: #{tpu_custom_call.1} parent=1 // pred_fallthru
      _
    // Predicated region
    $region18: #{tpu_custom_call.1} parent=1 // pred_check
      _
    $region19: #{tpu_custom_call.1} parent=1 // pred_check_branch
      %37 = sbr.rel (0) target = $region21
    $region20: #{tpu_custom_call.1} parent=1 // pred_region
      %38 = dma.done [#allocation7], 256
    $region21: #{tpu_custom_call.1} parent=1 // pred_fallthru
      _
    %p39 = scmp.eq.s32.totalorder 0, 0
    // Predicated region
    $region22: #{tpu_custom_call.1} parent=1 // pred_check
      %p40 = pneg %p39
    $region23: #{tpu_custom_call.1} parent=1 // pred_check_branch
      %42 = sbr.rel (%p40) target = $region25
    $region24: #{tpu_custom_call.1} parent=1 // pred_region
      %43 = vst [vmem:[#allocation2] sm:$0xff] 0.0
    $region25: #{tpu_custom_call.1} parent=1 // pred_fallthru
      _
    %v44 = vld [vmem:[#allocation3] sm:$0xff]
    %v45 = vld [vmem:[#allocation3 + $0x8] sm:$0xff]
    %v46 = vld [vmem:[#allocation6] sm:$0xff]
    %v47 = vld [vmem:[#allocation6 + $0x8] sm:$0xff]
    %v48 = vsub.f32 %v44, %v46
    %v49 = vsub.f32 %v45, %v47
    %v50 = vld [vmem:[%s2] sm:$0xff]
    %v51 = vmul.f32 %v48, %v48
    %v52 = vmul.f32 %v49, %v49
    %54 = vset.pattern.permute.xlu0 0
    %55 = vperm.xlu0 %54, %v50
    %v56 = vpop.permute.xlu0 %55
    %v58 = vmul.f32 %v56, %v51
    %v59 = vmul.f32 %v56, %v52
    %v60 = vadd.f32 %v58, %v59
    %v61 = vld [vmem:[#allocation2] sm:$0xff]
    %v62 = vadd.f32 %v61, %v60
    %63 = vst [vmem:[#allocation2] sm:$0xff] %v62
    // Predicated region
    $region26: #{tpu_custom_call.1} parent=1 // pred_check
      %p64 = pneg %p39
    $region27: #{tpu_custom_call.1} parent=1 // pred_check_branch
      %66 = sbr.rel (%p64) target = $region29
    $region28: #{tpu_custom_call.1} parent=1 // pred_region
      %v67 = vld [vmem:[#allocation2] sm:$0xff]
      %v68 = vadd.f32 %v67, 0.0
      %69 = vst [vmem:[#allocation8] sm:$0xff] %v68
    $region29: #{tpu_custom_call.1} parent=1 // pred_fallthru
      _
    // Predicated region
    $region30: #{tpu_custom_call.1} parent=1 // pred_check
      _
    $region31: #{tpu_custom_call.1} parent=1 // pred_check_branch
      %71 = sbr.rel (0) target = $region33
    $region32: #{tpu_custom_call.1} parent=1 // pred_region
      %s73 = ssub.s32 128, 128
      %74 = vsyncadd [#allocation5], %s73
      %s76 = sshll.u32 [#allocation8], 4
      %s77 = int_to_ptr.vmem [resolvable:$true] %s76
      %79 = dma.vmem_to_hbm [thread:$0]  %s77, 128, %s3, [#allocation5]
    $region33: #{tpu_custom_call.1} parent=1 // pred_fallthru
      _
    // Predicated region
    $region34: #{tpu_custom_call.1} parent=1 // pred_check
      _
    $region35: #{tpu_custom_call.1} parent=1 // pred_check_branch
      %81 = sbr.rel (0) target = $region37
    $region36: #{tpu_custom_call.1} parent=1 // pred_region
      %82 = dma.done [#allocation5], 128
    $region37: #{tpu_custom_call.1} parent=1 // pred_fallthru
      _
    %83 = vsyncpa [#allocation4], 1
    %84 = vsyncpa [#allocation7], 1
    %85 = vsyncpa [#allocation5], 1

</llo_original>
